<compile_context>
chip_gen: v6e
topology: v6e:2x2x1
jax: 0.10.0
libtpu: 0.0.40
codegen_flags: <defaults>
</compile_context>

<pallas_src>
import jax
import jax.numpy as jnp
from jax import lax
from jax.experimental import pallas as pl
from jax.experimental.pallas import tpu as pltpu


HIDDEN = 32


def _round_up(x, m):
    return ((x + m - 1) // m) * m


def mlp_kernel(x_ref, w1_ref, b1_ref, we_ref, be_ref, o_ref):
    """One batch tile of the fused MLP.

    x_ref : [TB, in_dim]   obs tile (untransposed)
    w1_ref: [32, in_dim]   b1_ref: [32, 1]
    we_ref: [out_dim, 32]  be_ref: [out_dim, 1]   (folded layers 2-4)
    o_ref : [out_dim, TB]  lane-dense output tile
    """
    # Layer 1: relu(W1 @ x^T + b1) -> [32, TB]; the x transpose folds into the
    # MXU via the contraction dims (no data movement).
    h = lax.dot_general(
        w1_ref[...], x_ref[...],
        dimension_numbers=(((1,), (1,)), ((), ())),
        preferred_element_type=jnp.float32,
    ) + b1_ref[...]
    h = jnp.maximum(h, 0.0)

    # Folded layers 2-4 (+ Tanh). Dropout is identity at inference.
    y = jnp.dot(we_ref[...], h, preferred_element_type=jnp.float32) + be_ref[...]
    o_ref[...] = jnp.tanh(y)


def network_forward(obs, params, *, block_batch=2048):
    """obs: [batch, in_dim] float32.  params: dict of weights/biases.

    Returns [batch, out_dim] float32 (same math as eval-mode PyTorch forward).
    """
    batch, in_dim = obs.shape
    out_dim = params["w4"].shape[1]

    # --- wrapper-side param prep (once per call; tiny) ---
    hp = jax.lax.Precision.HIGHEST
    w34 = jnp.matmul(params["w3"], params["w4"], precision=hp)          # [32, out_dim]
    w_eff = jnp.matmul(params["w2"], w34, precision=hp)                 # [32, out_dim]
    b_eff = (jnp.matmul(params["b2"], w34, precision=hp)
             + jnp.matmul(params["b3"], params["w4"], precision=hp)
             + params["b4"])                                            # [1, out_dim]

    w1_t = params["w1"].T        # [32, in_dim]
    b1_c = params["b1"].T        # [32, 1]
    we_t = w_eff.T               # [out_dim, 32]
    be_c = b_eff.T               # [out_dim, 1]

    # --- batch tile selection ---
    # Multiple of 128 (lane axis of the output tile), capped at block_batch,
    # and sized for >=2 grid steps when the batch is large (v7x dual-TC).
    # Tiny batches use a single full-extent block (exempt from (8,128) rule).
    cap = max(128, (block_batch // 128) * 128)
    if batch <= 128:
        tb = batch
    else:
        tb = min(cap, _round_up(pl.cdiv(batch, 2), 128))
    grid = (pl.cdiv(batch, tb),)

    out_t = pl.pallas_call(
        mlp_kernel,
        out_shape=jax.ShapeDtypeStruct((out_dim, batch), jnp.float32),
        grid=grid,
        in_specs=[
            # obs tile walks the batch (sublane) axis; partial tail tile is
            # handled by Pallas masking (no wrapper-side pad).
            pl.BlockSpec((tb, in_dim), lambda i: (i, 0)),
            # weights/biases: constant index_map -> VMEM-resident, DMA'd once
            pl.BlockSpec((HIDDEN, in_dim), lambda i: (0, 0)),
            pl.BlockSpec((HIDDEN, 1), lambda i: (0, 0)),
            pl.BlockSpec((out_dim, HIDDEN), lambda i: (0, 0)),
            pl.BlockSpec((out_dim, 1), lambda i: (0, 0)),
        ],
        out_specs=pl.BlockSpec((out_dim, tb), lambda i: (0, i)),
        compiler_params=pltpu.CompilerParams(
            dimension_semantics=("parallel",)),
    )(obs, w1_t, b1_c, we_t, be_c)

    # lane-dense kernel output -> [batch, out_dim] for the caller
    return out_t.T


def init_params(key, in_dim, out_dim):
    """Deterministic synthetic parameters (PyTorch-Linear-like uniform init)."""
    ks = jax.random.split(key, 8)

    def linear(kw, kb, fan_in, fan_out):
        bound = 1.0 / jnp.sqrt(jnp.float32(fan_in))
        w = jax.random.uniform(kw, (fan_in, fan_out), jnp.float32, -bound, bound)
        b = jax.random.uniform(kb, (1, fan_out), jnp.float32, -bound, bound)
        return w, b

    w1, b1 = linear(ks[0], ks[1], in_dim, HIDDEN)
    w2, b2 = linear(ks[2], ks[3], HIDDEN, HIDDEN)
    w3, b3 = linear(ks[4], ks[5], HIDDEN, HIDDEN)
    w4, b4 = linear(ks[6], ks[7], HIDDEN, out_dim)

    return {
        "w1": w1, "b1": b1,
        "w2": w2, "b2": b2,
        "w3": w3, "b3": b3,
        "w4": w4, "b4": b4,
        # module attribute, unused in forward()
        "log_std": jnp.ones((out_dim,), jnp.float32) * -4.0,
    }


def _jax_reference(obs, params):
    h = jnp.maximum(obs @ params["w1"] + params["b1"], 0.0)
    h = h @ params["w2"] + params["b2"]
    h = h @ params["w3"] + params["b3"]
    return jnp.tanh(h @ params["w4"] + params["b4"])


if __name__ == "__main__":
    key = jax.random.PRNGKey(0)
    k_obs, k_par, k_obs2, k_obs3 = jax.random.split(key, 4)

    batch, in_dim, out_dim = 8, 16, 8
    obs = jax.random.normal(k_obs, (batch, in_dim), dtype=jnp.float32)
    params = init_params(k_par, in_dim, out_dim)

    out = jax.block_until_ready(network_forward(obs, params))
    assert out.shape == (batch, out_dim)
    assert jnp.allclose(out, _jax_reference(obs, params), atol=5e-5), \
        "mismatch vs. JAX reference (small batch, single block)"

    # ragged batch, multiple grid steps with a masked partial tail block
    batch2 = 300
    obs2 = jax.random.normal(k_obs2, (batch2, in_dim), dtype=jnp.float32)
    out2 = jax.block_until_ready(network_forward(obs2, params, block_batch=128))
    assert out2.shape == (batch2, out_dim)
    assert jnp.allclose(out2, _jax_reference(obs2, params), atol=5e-5), \
        "mismatch vs. JAX reference (tiled ragged batch)"

    # default config, exercises the ">=2 grid steps" tiling path
    batch3 = 512
    obs3 = jax.random.normal(k_obs3, (batch3, in_dim), dtype=jnp.float32)
    out3 = jax.block_until_ready(network_forward(obs3, params))
    assert out3.shape == (batch3, out_dim)
    assert jnp.allclose(out3, _jax_reference(obs3, params), atol=5e-5), \
        "mismatch vs. JAX reference (default tiling)"

    print("KERNEL_OK")
</pallas_src>

<mosaic_0001>
module attributes {stable_mosaic.version = 11 : i64} {
  func.func @mlp_kernel(%arg0: i32, %arg1: memref<8x16xf32, #tpu.memory_space<vmem>>, %arg2: memref<32x16xf32, #tpu.memory_space<vmem>>, %arg3: memref<32x1xf32, #tpu.memory_space<vmem>>, %arg4: memref<8x32xf32, #tpu.memory_space<vmem>>, %arg5: memref<8x1xf32, #tpu.memory_space<vmem>>, %arg6: memref<8x8xf32, #tpu.memory_space<vmem>>) attributes {dimension_semantics = [#tpu.dimension_semantics<parallel>], iteration_bounds = array<i64: 1>, scalar_prefetch = 0 : i64, scratch_operands = 0 : i64, tpu.core_type = #tpu.core_type<tc>, window_params = [{transform_indices = @transform_0, window_bounds = array<i64: 8, 16>}, {pipeline_mode = #tpu.pipeline_mode<synchronous>, transform_indices = @transform_1, window_bounds = array<i64: 32, 16>}, {pipeline_mode = #tpu.pipeline_mode<synchronous>, transform_indices = @transform_2, window_bounds = array<i64: 32, 1>}, {pipeline_mode = #tpu.pipeline_mode<synchronous>, transform_indices = @transform_3, window_bounds = array<i64: 8, 32>}, {pipeline_mode = #tpu.pipeline_mode<synchronous>, transform_indices = @transform_4, window_bounds = array<i64: 8, 1>}, {transform_indices = @transform_5, window_bounds = array<i64: 8, 8>}]} {
    %c0 = arith.constant 0 : index
    %c0_0 = arith.constant 0 : index
    %0 = vector.load %arg2[%c0, %c0_0] : memref<32x16xf32, #tpu.memory_space<vmem>>, vector<32x16xf32>
    %c0_1 = arith.constant 0 : index
    %c0_2 = arith.constant 0 : index
    %1 = vector.load %arg1[%c0_1, %c0_2] : memref<8x16xf32, #tpu.memory_space<vmem>>, vector<8x16xf32>
    %cst = arith.constant dense<0.000000e+00> : vector<32x8xf32>
    %2 = tpu.matmul %0, %1, %cst {dimension_numbers = #tpu.dot_dimension_numbers<[1], [1], [0], [0], [0, 0, 1, 0], [], []>} : vector<32x16xf32>, vector<8x16xf32>, vector<32x8xf32> -> vector<32x8xf32>
    %c0_3 = arith.constant 0 : index
    %c0_4 = arith.constant 0 : index
    %3 = vector.load %arg3[%c0_3, %c0_4] : memref<32x1xf32, #tpu.memory_space<vmem>>, vector<32x1xf32>
    %4 = vector.broadcast %3 : vector<32x1xf32> to vector<32x8xf32>
    %5 = arith.addf %2, %4 : vector<32x8xf32>
    %cst_5 = arith.constant 0.000000e+00 : f32
    %6 = vector.broadcast %cst_5 : f32 to vector<32x8xf32>
    %7 = arith.maximumf %5, %6 : vector<32x8xf32>
    %c0_6 = arith.constant 0 : index
    %c0_7 = arith.constant 0 : index
    %8 = vector.load %arg4[%c0_6, %c0_7] : memref<8x32xf32, #tpu.memory_space<vmem>>, vector<8x32xf32>
    %cst_8 = arith.constant dense<0.000000e+00> : vector<8x8xf32>
    %9 = tpu.matmul %8, %7, %cst_8 {dimension_numbers = #tpu.dot_dimension_numbers<[1], [0], [0], [1], [0, 0, 1, 1], [], []>} : vector<8x32xf32>, vector<32x8xf32>, vector<8x8xf32> -> vector<8x8xf32>
    %c0_9 = arith.constant 0 : index
    %c0_10 = arith.constant 0 : index
    %10 = vector.load %arg5[%c0_9, %c0_10] : memref<8x1xf32, #tpu.memory_space<vmem>>, vector<8x1xf32>
    %11 = vector.broadcast %10 : vector<8x1xf32> to vector<8x8xf32>
    %12 = arith.addf %9, %11 : vector<8x8xf32>
    %13 = math.tanh %12 : vector<8x8xf32>
    %c0_11 = arith.constant 0 : index
    %c0_12 = arith.constant 0 : index
    %14 = vector.load %arg6[%c0_11, %c0_12] : memref<8x8xf32, #tpu.memory_space<vmem>>, vector<8x8xf32>
    tpu.vector_store %arg6[%c0_11, %c0_12], %13 {strides = array<i32>} : memref<8x8xf32, #tpu.memory_space<vmem>>, vector<8x8xf32>,
    return
  }
  func.func @transform_0(%arg0: i32) -> (i32, i32) {
    %c0_i32 = arith.constant 0 : i32
    %c0_i32_0 = arith.constant 0 : i32
    return %arg0, %c0_i32 : i32, i32
  }
  func.func @transform_1(%arg0: i32) -> (i32, i32) {
    %c0_i32 = arith.constant 0 : i32
    %c0_i32_0 = arith.constant 0 : i32
    %c0_i32_1 = arith.constant 0 : i32
    return %c0_i32, %c0_i32_0 : i32, i32
  }
  func.func @transform_2(%arg0: i32) -> (i32, i32) {
    %c0_i32 = arith.constant 0 : i32
    %c0_i32_0 = arith.constant 0 : i32
    %c0_i32_1 = arith.constant 0 : i32
    return %c0_i32, %c0_i32_0 : i32, i32
  }
  func.func @transform_3(%arg0: i32) -> (i32, i32) {
    %c0_i32 = arith.constant 0 : i32
    %c0_i32_0 = arith.constant 0 : i32
    %c0_i32_1 = arith.constant 0 : i32
    return %c0_i32, %c0_i32_0 : i32, i32
  }
  func.func @transform_4(%arg0: i32) -> (i32, i32) {
    %c0_i32 = arith.constant 0 : i32
    %c0_i32_0 = arith.constant 0 : i32
    %c0_i32_1 = arith.constant 0 : i32
    return %c0_i32, %c0_i32_0 : i32, i32
  }
  func.func @transform_5(%arg0: i32) -> (i32, i32) {
    %c0_i32 = arith.constant 0 : i32
    %c0_i32_0 = arith.constant 0 : i32
    return %c0_i32, %arg0 : i32, i32
  }
}

</mosaic_0001>

<llo_original>
// kernel: tpu_custom_call.1
$region0: #{tpu_custom_call.1}
  #allocation0 [shape = 'u32[]', space=smem, size = 0x4, offset = 0x4, fixed_abs, tag = 'smem constant byte address 0x4 - core index']
  #allocation1 [shape = 'u32[144,128]{1,0:T(1,128)}', space=vmem, size = 0x12000, scoped, tag = 'internal scratch']
  %s0 = inlined_call_operand.vmem [shape: f32[8,16], index: 0, kind: input, shape index: {}]
  %s1 = inlined_call_operand.vmem [shape: f32[32,16], index: 1, kind: input, shape index: {}]
  %s2 = inlined_call_operand.vmem [shape: f32[32,1], index: 2, kind: input, shape index: {}]
  %s3 = inlined_call_operand.vmem [shape: f32[8,32], index: 3, kind: input, shape index: {}]
  %s4 = inlined_call_operand.vmem [shape: f32[8,1], index: 4, kind: input, shape index: {}]
  %s5 = inlined_call_operand.hbm [shape: f32[8,8], index: 5, kind: output, shape index: {}]
  %s6 = sld [smem:[#allocation0]]
  $region30: #{tpu_custom_call.1} parent=0
    _
  %s8 = ssub.s32 1, %s6
  %s9 = scalar_select 0, %s8, %s6
  $region1: #{tpu_custom_call.1} parent=0
    #allocation2 [shape = 'u8[4096]{0}', space=vmem, size = 0x1000, scoped, tag = 'output window, operand 0, single buffered']
    #allocation3 [shape = 's32[1]{0}', space=sflag, size = 0x4, scoped, tag = 'scoped memory for tpu_custom_call.1']
    %10 = vsyncpa [#allocation3], 0
    // Predicated region
    $region2: #{tpu_custom_call.1} parent=1 // pred_check
      _
    $region3: #{tpu_custom_call.1} parent=1 // pred_check_branch
      %12 = sbr.rel (0) target = $region5
    $region4: #{tpu_custom_call.1} parent=1 // pred_region
      _
    $region5: #{tpu_custom_call.1} parent=1 // pred_fallthru
      _
    // Predicated region
    $region6: #{tpu_custom_call.1} parent=1 // pred_check
      _
    $region7: #{tpu_custom_call.1} parent=1 // pred_check_branch
      %14 = sbr.rel (0) target = $region9
    $region8: #{tpu_custom_call.1} parent=1 // pred_region
      _
    $region9: #{tpu_custom_call.1} parent=1 // pred_fallthru
      _
    // Predicated region
    $region10: #{tpu_custom_call.1} parent=1 // pred_check
      _
    $region11: #{tpu_custom_call.1} parent=1 // pred_check_branch
      %16 = sbr.rel (0) target = $region13
    $region12: #{tpu_custom_call.1} parent=1 // pred_region
      _
    $region13: #{tpu_custom_call.1} parent=1 // pred_fallthru
      _
    // Predicated region
    $region14: #{tpu_custom_call.1} parent=1 // pred_check
      _
    $region15: #{tpu_custom_call.1} parent=1 // pred_check_branch
      %18 = sbr.rel (0) target = $region17
    $region16: #{tpu_custom_call.1} parent=1 // pred_region
      _
    $region17: #{tpu_custom_call.1} parent=1 // pred_fallthru
      _
    // Predicated region
    $region18: #{tpu_custom_call.1} parent=1 // pred_check
      _
    $region19: #{tpu_custom_call.1} parent=1 // pred_check_branch
      %20 = sbr.rel (0) target = $region21
    $region20: #{tpu_custom_call.1} parent=1 // pred_region
      _
    $region21: #{tpu_custom_call.1} parent=1 // pred_fallthru
      _
    %v21 = vld [vmem:[%s1] sm:$0xff]
    %v22 = vld [vmem:[%s1 + $0x8] sm:$0xff]
    %v23 = vld [vmem:[%s1 + $0x10] sm:$0xff]
    %v24 = vld [vmem:[%s1 + $0x18] sm:$0xff]
    %v25 = vld [vmem:[%s0] sm:$0xff]
    %v26 = vld [vmem:[%s2] sm:$0xff]
    %v27 = vld [vmem:[%s2 + $0x8] sm:$0xff]
    %v28 = vld [vmem:[%s2 + $0x10] sm:$0xff]
    %v29 = vld [vmem:[%s2 + $0x18] sm:$0xff]
    %31 = vset.pattern.permute.xlu0 0
    %32 = vperm.xlu0 %31, %v26
    %v33 = vpop.permute.xlu0 %32
    %36 = vset.pattern.permute.xlu0 0
    %37 = vperm.xlu0 %36, %v27
    %v38 = vpop.permute.xlu0 %37
    %41 = vset.pattern.permute.xlu0 0
    %42 = vperm.xlu0 %41, %v28
    %v43 = vpop.permute.xlu0 %42
    %46 = vset.pattern.permute.xlu0 0
    %47 = vperm.xlu0 %46, %v29
    %v48 = vpop.permute.xlu0 %47
    %vm50 = vcmask 130048
    %v52 = vsel %vm50, %v21, 0
    %v55 = vsel %vm50, %v22, 0
    %v58 = vsel %vm50, %v23, 0
    %v61 = vsel %vm50, %v24, 0
    %v64 = vsel %vm50, %v25, 0
    %66 = vmatprep.subr.mxu0 0.0
    %67 = vmatpush1.xpose.msra.mxu0 0.0
    %68 = vmatprep.subr.mxu0 0.0
    %69 = vmatpush1.xpose.msra.mxu0 0.0
    %70 = vmatprep.subr.mxu0 0.0
    %71 = vmatpush1.xpose.msra.mxu0 0.0
    %72 = vmatprep.subr.mxu0 0.0
    %73 = vmatpush1.xpose.msra.mxu0 0.0
    %74 = vmatprep.subr.mxu0 0.0
    %75 = vmatpush1.xpose.msra.mxu0 0.0
    %76 = vmatprep.subr.mxu0 0.0
    %77 = vmatpush1.xpose.msra.mxu0 0.0
    %78 = vmatprep.subr.mxu0 0.0
    %79 = vmatpush1.xpose.msra.mxu0 0.0
    %80 = vmatprep.subr.mxu0 0.0
    %81 = vmatpush1.xpose.msra.mxu0 0.0
    %82 = vmatprep.subr.mxu0 0.0
    %83 = vmatpush1.xpose.msra.mxu0 0.0
    %84 = vmatprep.subr.mxu0 0.0
    %85 = vmatpush1.xpose.msra.mxu0 0.0
    %86 = vmatprep.subr.mxu0 0.0
    %87 = vmatpush1.xpose.msra.mxu0 0.0
    %88 = vmatprep.subr.mxu0 0.0
    %89 = vmatpush1.xpose.msra.mxu0 0.0
    %90 = vmatprep.subr.mxu0 0.0
    %91 = vmatpush1.xpose.msra.mxu0 0.0
    %92 = vmatprep.subr.mxu0 0.0
    %93 = vmatpush1.xpose.msra.mxu0 0.0
    %94 = vmatprep.subr.mxu0 0.0
    %95 = vmatpush1.xpose.msra.mxu0 0.0
    %96 = vmatprep.subr.mxu0 0.0
    %97 = vmatpush1.xpose.msra.mxu0 %v64
    %98 = vmatprep.subr.mxu0 0.0
    %99 = vmatpush2.xpose.msra.mxu0 0.0
    %100 = vmatprep.subr.mxu0 0.0
    %101 = vmatpush2.xpose.msra.mxu0 0.0
    %102 = vmatprep.subr.mxu0 0.0
    %103 = vmatpush2.xpose.msra.mxu0 0.0
    %104 = vmatprep.subr.mxu0 0.0
    %105 = vmatpush2.xpose.msra.mxu0 0.0
    %106 = vmatprep.subr.mxu0 0.0
    %107 = vmatpush2.xpose.msra.mxu0 0.0
    %108 = vmatprep.subr.mxu0 0.0
    %109 = vmatpush2.xpose.msra.mxu0 0.0
    %110 = vmatprep.subr.mxu0 0.0
    %111 = vmatpush2.xpose.msra.mxu0 0.0
    %112 = vmatprep.subr.mxu0 0.0
    %113 = vmatpush2.xpose.msra.mxu0 0.0
    %114 = vmatprep.subr.mxu0 0.0
    %115 = vmatpush2.xpose.msra.mxu0 0.0
    %116 = vmatprep.subr.mxu0 0.0
    %117 = vmatpush2.xpose.msra.mxu0 0.0
    %118 = vmatprep.subr.mxu0 0.0
    %119 = vmatpush2.xpose.msra.mxu0 0.0
    %120 = vmatprep.subr.mxu0 0.0
    %121 = vmatpush2.xpose.msra.mxu0 0.0
    %122 = vmatprep.subr.mxu0 0.0
    %123 = vmatpush2.xpose.msra.mxu0 0.0
    %124 = vmatprep.subr.mxu0 0.0
    %125 = vmatpush2.xpose.msra.mxu0 0.0
    %126 = vmatprep.subr.mxu0 0.0
    %127 = vmatpush2.xpose.msra.mxu0 0.0
    %128 = vmatprep.subr.mxu0 0.0
    %129 = vmatpush2.xpose.msra.mxu0 0.0
    %130 = vmatprep.mubr.f32.mxu0 0.0
    %131 = vmatmul.mubr.f32.gmra.mxu0 %v52
    %v132 = vpop.f32.mrf.mxu0
    %v133 = vadd.f32 %v33, %v132
    %v134 = vpop.f32.mrf.mxu0
    %135 = vmatprep.mubr.f32.mxu0 0.0
    %136 = vmatmul.mubr.f32.gmra.mxu0 %v55
    %v137 = vpop.f32.mrf.mxu0
    %v138 = vadd.f32 %v38, %v137
    %v139 = vpop.f32.mrf.mxu0
    %140 = vmatprep.mubr.f32.mxu0 0.0
    %141 = vmatmul.mubr.f32.gmra.mxu0 %v58
    %v142 = vpop.f32.mrf.mxu0
    %v143 = vadd.f32 %v43, %v142
    %v144 = vpop.f32.mrf.mxu0
    %145 = vmatprep.mubr.f32.mxu0 0.0
    %146 = vmatmul.mubr.f32.gmra.mxu0 %v61
    %v147 = vpop.f32.mrf.mxu0
    %v148 = vadd.f32 %v48, %v147
    %v149 = vpop.f32.mrf.mxu0
    %150 = vdwg.mxu0
    %v151 = vmax.f32 %v133, 0.0
    %v152 = vmax.f32 %v138, 0.0
    %v153 = vmax.f32 %v143, 0.0
    %v154 = vmax.f32 %v148, 0.0
    %v155 = vld [vmem:[%s3] sm:$0xff]
    %v156 = vld [vmem:[%s4] sm:$0xff]
    %158 = vset.pattern.permute.xlu0 0
    %159 = vperm.xlu0 %158, %v156
    %v160 = vpop.permute.xlu0 %159
    %vm162 = vcmask 261120
    %v164 = vsel %vm162, %v155, 0
    %166 = vmatprep.subr.mxu0 0.0
    %167 = vmatpush1.msra.mxu0 0.0
    %168 = vmatprep.subr.mxu0 0.0
    %169 = vmatpush1.msra.mxu0 0.0
    %170 = vmatprep.subr.mxu0 0.0
    %171 = vmatpush1.msra.mxu0 0.0
    %172 = vmatprep.subr.mxu0 0.0
    %173 = vmatpush1.msra.mxu0 0.0
    %174 = vmatprep.subr.mxu0 0.0
    %175 = vmatpush1.msra.mxu0 0.0
    %176 = vmatprep.subr.mxu0 0.0
    %177 = vmatpush1.msra.mxu0 0.0
    %178 = vmatprep.subr.mxu0 0.0
    %179 = vmatpush1.msra.mxu0 0.0
    %180 = vmatprep.subr.mxu0 0.0
    %181 = vmatpush1.msra.mxu0 0.0
    %182 = vmatprep.subr.mxu0 0.0
    %183 = vmatpush1.msra.mxu0 0.0
    %184 = vmatprep.subr.mxu0 0.0
    %185 = vmatpush1.msra.mxu0 0.0
    %186 = vmatprep.subr.mxu0 0.0
    %187 = vmatpush1.msra.mxu0 0.0
    %188 = vmatprep.subr.mxu0 0.0
    %189 = vmatpush1.msra.mxu0 0.0
    %190 = vmatprep.subr.mxu0 0.0
    %191 = vmatpush1.msra.mxu0 %v154
    %192 = vmatprep.subr.mxu0 0.0
    %193 = vmatpush1.msra.mxu0 %v153
    %194 = vmatprep.subr.mxu0 0.0
    %195 = vmatpush1.msra.mxu0 %v152
    %196 = vmatprep.subr.mxu0 0.0
    %197 = vmatpush1.msra.mxu0 %v151
    %198 = vmatprep.subr.mxu0 0.0
    %199 = vmatpush2.msra.mxu0 0.0
    %200 = vmatprep.subr.mxu0 0.0
    %201 = vmatpush2.msra.mxu0 0.0
    %202 = vmatprep.subr.mxu0 0.0
    %203 = vmatpush2.msra.mxu0 0.0
    %204 = vmatprep.subr.mxu0 0.0
    %205 = vmatpush2.msra.mxu0 0.0
    %206 = vmatprep.subr.mxu0 0.0
    %207 = vmatpush2.msra.mxu0 0.0
    %208 = vmatprep.subr.mxu0 0.0
    %209 = vmatpush2.msra.mxu0 0.0
    %210 = vmatprep.subr.mxu0 0.0
    %211 = vmatpush2.msra.mxu0 0.0
    %212 = vmatprep.subr.mxu0 0.0
    %213 = vmatpush2.msra.mxu0 0.0
    %214 = vmatprep.subr.mxu0 0.0
    %215 = vmatpush2.msra.mxu0 0.0
    %216 = vmatprep.subr.mxu0 0.0
    %217 = vmatpush2.msra.mxu0 0.0
    %218 = vmatprep.subr.mxu0 0.0
    %219 = vmatpush2.msra.mxu0 0.0
    %220 = vmatprep.subr.mxu0 0.0
    %221 = vmatpush2.msra.mxu0 0.0
    %222 = vmatprep.subr.mxu0 0.0
    %223 = vmatpush2.msra.mxu0 0.0
    %224 = vmatprep.subr.mxu0 0.0
    %225 = vmatpush2.msra.mxu0 0.0
    %226 = vmatprep.subr.mxu0 0.0
    %227 = vmatpush2.msra.mxu0 0.0
    %228 = vmatprep.subr.mxu0 0.0
    %229 = vmatpush2.msra.mxu0 0.0
    %230 = vmatprep.mubr.f32.mxu0 0.0
    %231 = vmatmul.mubr.f32.gmra.mxu0 %v164
    %v232 = vpop.f32.mrf.mxu0
    %v233 = vadd.f32 %v160, %v232
    %v234 = vpop.f32.mrf.mxu0
    %235 = vdwg.mxu0
    %v236 = vtanh.pop %v233
    %vm237 = vcmask 64512
    %238 = vst.msk [vmem:[#allocation2] sm:$0xff] %vm237, %v236
    // Predicated region
    $region22: #{tpu_custom_call.1} parent=1 // pred_check
      _
    $region23: #{tpu_custom_call.1} parent=1 // pred_check_branch
      %240 = sbr.rel (0) target = $region25
    $region24: #{tpu_custom_call.1} parent=1 // pred_region
      %s242 = ssub.s32 128, 128
      %243 = vsyncadd [#allocation3], %s242
      %s245 = sshll.u32 [#allocation2], 4
      %s246 = int_to_ptr.vmem [resolvable:$true] %s245
      %248 = dma.vmem_to_hbm [thread:$0]  %s246, 128, %s5, [#allocation3]
    $region25: #{tpu_custom_call.1} parent=1 // pred_fallthru
      _
    // Predicated region
    $region26: #{tpu_custom_call.1} parent=1 // pred_check
      _
    $region27: #{tpu_custom_call.1} parent=1 // pred_check_branch
      %250 = sbr.rel (0) target = $region29
    $region28: #{tpu_custom_call.1} parent=1 // pred_region
      %251 = dma.done [#allocation3], 128
    $region29: #{tpu_custom_call.1} parent=1 // pred_fallthru
      _
    %252 = vsyncpa [#allocation3], 1

</llo_original>
